<compile_context>
chip_gen: v7x
topology: tpu7x:2x2x1
jax: 0.10.0
libtpu: 0.0.40
codegen_flags: <defaults>
</compile_context>

<pallas_src>
import functools

import jax
import jax.numpy as jnp
from jax.experimental import pallas as pl
from jax.experimental.pallas import tpu as pltpu

_LANES = 128
# Sublane packing multiple per itemsize (f32 -> 8 rows, bf16 -> 16, int8 -> 32).
_SUBLANE_MULT = {4: 8, 2: 16, 1: 32}
# Below this many bytes plain (fused) XLA beats a pallas_call: wrapper ops and
# the ~0.35 us/step launch overhead dominate the elementwise work.
_SMALL_FAST_PATH_BYTES = 1 << 20


def _device_kind():
    try:
        return jax.devices()[0].device_kind.lower()
    except Exception:  # pragma: no cover - defensive (e.g. no devices yet)
        return ""


def _chip_params():
    """Returns (target block bytes, dimension-semantics for the grid axis)."""
    kind = _device_kind()
    if "v7" in kind:
        # 2 TensorCores / 64 MiB physical VMEM: 8 MiB blocks, shard the grid
        # across both cores.
        return 8 << 20, pltpu.CORE_PARALLEL
    if "v6" in kind:
        return 4 << 20, "parallel"
    # v5e and older / unknown: 2 MiB keeps 4 double-buffers well inside the
    # 16 MiB scoped-VMEM default.
    return 2 << 20, "parallel"


def _apply_activation(x, activation, lrelu_param):
    if activation == "tanh":
        return jnp.tanh(x)
    if activation == "sigmoid":
        return jax.nn.sigmoid(x)
    if activation == "relu":
        return jnp.maximum(x, jnp.zeros_like(x))
    if activation == "lrelu":
        return jnp.where(x >= 0, x, x * jnp.asarray(lrelu_param, x.dtype))
    raise NotImplementedError(activation)


def _param_act_kernel(w_ref, o_ref, *, activation, lrelu_param, compute_f32):
    x = w_ref[...]
    if activation in ("tanh", "sigmoid") and compute_f32:
        # No bf16 EUP on v5e and older: do the transcendental in f32.
        y = _apply_activation(x.astype(jnp.float32), activation, lrelu_param)
        o_ref[...] = y.astype(o_ref.dtype)
    else:
        o_ref[...] = _apply_activation(x, activation, lrelu_param).astype(o_ref.dtype)


def param_act_forward(weight, activation=None, lrelu_param=0.2,
                      *, min_pallas_bytes=_SMALL_FAST_PATH_BYTES):
    """Pallas equivalent of ParamAct.forward(): returns activation(weight)."""
    if activation is None:
        # PyTorch forward() returns the parameter unchanged -- no work at all.
        return weight

    orig_shape = weight.shape
    dtype = weight.dtype
    itemsize = jnp.dtype(dtype).itemsize
    n = int(weight.size)

    # Small-tensor fast path: ParamAct parameters are typically tiny; let XLA
    # fuse the elementwise op for free instead of paying the custom-call
    # launch + layout-plumbing cost.
    if n * itemsize < min_pallas_bytes:
        return _apply_activation(weight, activation, lrelu_param).astype(dtype)

    kind = _device_kind()
    block_bytes, dim_sem = _chip_params()
    sub_mult = _SUBLANE_MULT.get(itemsize, 8)
    is_bf16 = jnp.dtype(dtype) == jnp.dtype(jnp.bfloat16)
    bf16_native = ("v6" in kind) or ("v7" in kind)
    compute_f32 = (
        jnp.issubdtype(dtype, jnp.floating)
        and itemsize < 4
        and not (is_bf16 and bf16_native)
    )

    # Lane-dense (rows, 128) slab.  Pad only to a whole number of lanes
    # (<= 127 elements) -- never to a block multiple; Pallas masks the partial
    # final block instead of paying extra HBM traffic on garbage.
    rows = pl.cdiv(n, _LANES)
    n_padded = rows * _LANES
    needs_pad = n_padded != n

    flat = weight.reshape(-1)
    if needs_pad:
        # Note: pad fusion into the input DMA (allow_input_fusion) is left off
        # to keep the lowering maximally portable across generations.
        flat = jnp.pad(flat, (0, n_padded - n))
    x2d = flat.reshape(rows, _LANES)  # free for a contiguous array

    target_rows = max(
        sub_mult, (block_bytes // (_LANES * itemsize)) // sub_mult * sub_mult
    )
    if rows <= target_rows:
        block_rows = rows           # single full-extent block (always legal)
    else:
        block_rows = target_rows    # (8k, 128)-aligned; last block is masked
    grid = pl.cdiv(rows, block_rows)
    if grid == 1:
        dim_sem = "arbitrary"       # nothing to shard across cores

    kernel = functools.partial(
        _param_act_kernel,
        activation=activation,
        lrelu_param=lrelu_param,
        compute_f32=compute_f32,
    )

    out2d = pl.pallas_call(
        kernel,
        out_shape=jax.ShapeDtypeStruct((rows, _LANES), dtype),
        grid=(grid,),
        in_specs=[pl.BlockSpec((block_rows, _LANES), lambda i: (i, 0))],
        out_specs=pl.BlockSpec((block_rows, _LANES), lambda i: (i, 0)),
        # Donate the padded temp to the output (never the no-pad reshape view
        # of the learnable weight, which must not be clobbered).
        input_output_aliases=({0: 0} if needs_pad else {}),
        compiler_params=pltpu.CompilerParams(
            dimension_semantics=(dim_sem,),
            # 2 double-buffered copies of (input + output) blocks + headroom.
            vmem_limit_bytes=4 * block_rows * _LANES * itemsize + (8 << 20),
        ),
    )(x2d)

    out_flat = out2d.reshape(-1)
    if needs_pad:
        out_flat = out_flat[:n]
    return out_flat.reshape(orig_shape)


if __name__ == "__main__":
    key = jax.random.PRNGKey(0)
    k0, k1, k2, k3 = jax.random.split(key, 4)

    # 1) ParamAct(size=(2, 4, 16, 16), activation='tanh'): the module's typical
    #    tiny-parameter case takes the fused-XLA fast path.
    w_small = jax.random.normal(k0, (2, 4, 16, 16), dtype=jnp.float32)
    out_small = jax.block_until_ready(param_act_forward(w_small, activation="tanh"))
    assert out_small.shape == w_small.shape and out_small.dtype == w_small.dtype
    assert bool(jnp.allclose(out_small, jnp.tanh(w_small), atol=1e-6, rtol=1e-6))

    # 2) Same tensor forced through the Pallas kernel (128-aligned, no pad,
    #    single full-extent block).
    out_forced = jax.block_until_ready(
        param_act_forward(w_small, activation="tanh", min_pallas_bytes=0))
    assert bool(jnp.allclose(out_forced, jnp.tanh(w_small), atol=1e-6, rtol=1e-6))

    # 3) Large, non-128-aligned parameter: multi-block grid, minimal lane pad,
    #    masked final block, donated padded temp ('lrelu').
    w_big = jax.random.normal(k1, (2049, 1037), dtype=jnp.float32)
    out_big = jax.block_until_ready(param_act_forward(w_big, activation="lrelu"))
    ref_big = jnp.where(w_big >= 0, w_big, 0.2 * w_big)
    assert out_big.shape == w_big.shape and out_big.dtype == w_big.dtype
    assert bool(jnp.allclose(out_big, ref_big, atol=1e-6, rtol=1e-6))

    # 4) bf16 sigmoid through the kernel (bf16-native EUP path on v6e/v7x,
    #    f32 upcast on v5e and older).
    w_bf16 = jax.random.normal(k2, (1024, 513), dtype=jnp.float32).astype(jnp.bfloat16)
    out_bf16 = jax.block_until_ready(
        param_act_forward(w_bf16, activation="sigmoid", min_pallas_bytes=0))
    ref_bf16 = jax.nn.sigmoid(w_bf16.astype(jnp.float32))
    assert out_bf16.shape == w_bf16.shape and out_bf16.dtype == jnp.bfloat16
    assert bool(jnp.allclose(out_bf16.astype(jnp.float32), ref_bf16, atol=2e-2))

    # 5) activation=None short-circuits (returns the parameter as-is).
    w_none = jax.random.normal(k3, (3, 5, 7), dtype=jnp.float32)
    assert bool(jnp.array_equal(param_act_forward(w_none, activation=None), w_none))

    print("KERNEL_OK")
</pallas_src>

<mosaic_0001>
module attributes {stable_mosaic.version = 11 : i64} {
  func.func @_param_act_kernel(%arg0: i32, %arg1: memref<16x128xf32, #tpu.memory_space<vmem>>, %arg2: memref<16x128xf32, #tpu.memory_space<vmem>>) attributes {dimension_semantics = [#tpu.dimension_semantics<arbitrary>], iteration_bounds = array<i64: 1>, scalar_prefetch = 0 : i64, scratch_operands = 0 : i64, tpu.core_type = #tpu.core_type<tc>, window_params = [{transform_indices = @transform_0, window_bounds = array<i64: 16, 128>}, {transform_indices = @transform_1, window_bounds = array<i64: 16, 128>}]} {
    %c0 = arith.constant 0 : index
    %c0_0 = arith.constant 0 : index
    %0 = vector.load %arg1[%c0, %c0_0] : memref<16x128xf32, #tpu.memory_space<vmem>>, vector<16x128xf32>
    %1 = math.tanh %0 : vector<16x128xf32>
    %c0_1 = arith.constant 0 : index
    %c0_2 = arith.constant 0 : index
    %2 = vector.load %arg2[%c0_1, %c0_2] : memref<16x128xf32, #tpu.memory_space<vmem>>, vector<16x128xf32>
    tpu.vector_store %arg2[%c0_1, %c0_2], %1 {strides = array<i32>} : memref<16x128xf32, #tpu.memory_space<vmem>>, vector<16x128xf32>,
    return
  }
  func.func @transform_0(%arg0: i32) -> (i32, i32) {
    %c0_i32 = arith.constant 0 : i32
    %c0_i32_0 = arith.constant 0 : i32
    return %arg0, %c0_i32 : i32, i32
  }
  func.func @transform_1(%arg0: i32) -> (i32, i32) {
    %c0_i32 = arith.constant 0 : i32
    %c0_i32_0 = arith.constant 0 : i32
    return %arg0, %c0_i32 : i32, i32
  }
}

</mosaic_0001>

<llo_original>
// kernel: tpu_custom_call.1
$region0: #{tpu_custom_call.1}
  #allocation0 [shape = 'u32[]', space=smem, size = 0x4, offset = 0x4, fixed_abs, tag = 'smem constant byte address 0x4 - core index']
  #allocation1 [shape = 'u32[144,128]{1,0:T(1,128)}', space=vmem, size = 0x12000, scoped, tag = 'internal scratch']
  %s0 = inlined_call_operand.hbm [shape: f32[16,128], index: 0, kind: input, shape index: {}]
  %s1 = inlined_call_operand.hbm [shape: f32[16,128], index: 1, kind: output, shape index: {}]
  %s2 = sld [smem:[#allocation0]]
  $region18: #{tpu_custom_call.1} parent=0
    _
  %s4 = ssub.s32 1, %s2
  %s5 = scalar_select 0, %s4, %s2
  $region1: #{tpu_custom_call.1} parent=0
    #allocation2 [shape = 'u8[8192]{0}', space=vmem, size = 0x2000, scoped, tag = 'input window, operand 0, single buffered']
    #allocation3 [shape = 's32[1]{0}', space=sflag, size = 0x4, scoped, tag = 'scoped memory for tpu_custom_call.1']
    #allocation4 [shape = 's32[1]{0}', space=sflag, size = 0x4, scoped, tag = 'scoped memory for tpu_custom_call.1']
    #allocation5 [shape = 'u8[8192]{0}', space=vmem, size = 0x2000, scoped, tag = 'output window, operand 0, single buffered']
    %6 = vsyncpa [#allocation3], 0
    %7 = vsyncpa [#allocation4], 0
    // Predicated region
    $region2: #{tpu_custom_call.1} parent=1 // pred_check
      _
    $region3: #{tpu_custom_call.1} parent=1 // pred_check_branch
      %9 = sbr.rel (0) target = $region5
    $region4: #{tpu_custom_call.1} parent=1 // pred_region
      %s11 = ssub.s32 256, 256
      %12 = vsyncadd [#allocation3], %s11
      %s13 = sshll.u32 [#allocation2], 4
      %s14 = int_to_ptr.vmem [resolvable:$true] %s13
      %19 = dma.hbm_to_vmem [thread:$0]  %s0, 256, %s14, [#allocation3], 128, 128, 8
    $region5: #{tpu_custom_call.1} parent=1 // pred_fallthru
      _
    // Predicated region
    $region6: #{tpu_custom_call.1} parent=1 // pred_check
      _
    $region7: #{tpu_custom_call.1} parent=1 // pred_check_branch
      %21 = sbr.rel (0) target = $region9
    $region8: #{tpu_custom_call.1} parent=1 // pred_region
      %22 = dma.done [#allocation3], 256
    $region9: #{tpu_custom_call.1} parent=1 // pred_fallthru
      _
    %v23 = vld [vmem:[#allocation2] sm:$0xff]
    %v24 = vld [vmem:[#allocation2 + $0x8] sm:$0xff]
    %v25 = vtanh.pop %v23
    %v26 = vtanh.pop %v24
    %27 = vst [vmem:[#allocation5] sm:$0xff] %v25
    %28 = vst [vmem:[#allocation5 + $0x8] sm:$0xff] %v26
    // Predicated region
    $region10: #{tpu_custom_call.1} parent=1 // pred_check
      _
    $region11: #{tpu_custom_call.1} parent=1 // pred_check_branch
      %30 = sbr.rel (0) target = $region13
    $region12: #{tpu_custom_call.1} parent=1 // pred_region
      %s32 = ssub.s32 256, 256
      %33 = vsyncadd [#allocation4], %s32
      %s34 = sshll.u32 [#allocation5], 4
      %s35 = int_to_ptr.vmem [resolvable:$true] %s34
      %40 = dma.vmem_to_hbm [thread:$0]  %s35, 256, %s1, [#allocation4], 128, 128, 8
    $region13: #{tpu_custom_call.1} parent=1 // pred_fallthru
      _
    // Predicated region
    $region14: #{tpu_custom_call.1} parent=1 // pred_check
      _
    $region15: #{tpu_custom_call.1} parent=1 // pred_check_branch
      %42 = sbr.rel (0) target = $region17
    $region16: #{tpu_custom_call.1} parent=1 // pred_region
      %43 = dma.done [#allocation4], 256
    $region17: #{tpu_custom_call.1} parent=1 // pred_fallthru
      _
    %44 = vsyncpa [#allocation3], 1
    %45 = vsyncpa [#allocation4], 1

</llo_original>
